<compile_context>
chip_gen: v7x
topology: tpu7x:2x2x1
jax: 0.10.0
libtpu: 0.0.40
codegen_flags: <defaults>
</compile_context>

<pallas_src>
import jax
import jax.numpy as jnp
from jax.experimental import pallas as pl
from jax.experimental.pallas import tpu as pltpu

MARGIN = 1.0
_LANES = 128     # vreg lane width
_SUBLANES = 8    # f32 vreg sublane count


def _round_up(a, b):
    return ((a + b - 1) // b) * b


def _default_num_parallel():
    # The 2-way split only pays on multi-TensorCore chips; on single-TC v5e/v6e it just adds a
    # grid axis.  Unknown chips default to 2 (correct everywhere, negligible cost if serialized).
    try:
        kind = jax.devices()[0].device_kind.lower()
    except Exception:
        return 2
    if any(tag in kind for tag in ("v5 lite", "v5e", "v5litepod", "v6 lite", "v6e")):
        return 1
    return 2


def hinge_loss(x, target, *, block_rows=8192, num_parallel=None, min_kernel_elems=1 << 16):
    """mean(max(0, MARGIN - x * target)) over all elements (HingeLoss.forward)."""
    assert x.shape == target.shape, "input/target must match"
    n = x.size
    if n == 0:
        return jnp.float32(jnp.nan)   # matches torch .mean() of an empty tensor

    # Small-input fast path: pallas_call fixed cost dominates; plain XLA fusion is faster.
    if n < min_kernel_elems:
        xf = x.astype(jnp.float32)
        tf = target.astype(jnp.float32)
        return jnp.mean(jnp.maximum(MARGIN - xf * tf, 0.0))

    if num_parallel is None:
        num_parallel = _default_num_parallel()

    # Lane-dense [rows, 128] view.  For n % 128 == 0 this is a free contiguous reshape (no HBM
    # copy).  Otherwise pad only to the next multiple of 128 with neutral values
    # (margin - margin*1 == 0), so padded elements contribute exactly zero hinge.
    # TODO(synk): for huge ragged inputs this pad is still one extra HBM copy; it could be removed
    # with a 1-D BlockSpec + flat-index masking at the cost of 1-D layout/lowering risk.
    rows = pl.cdiv(n, _LANES)
    xf = x.reshape(-1)
    tf = target.reshape(-1)
    pad = rows * _LANES - n
    if pad:
        xf = jnp.pad(xf, (0, pad), constant_values=MARGIN)
        tf = jnp.pad(tf, (0, pad), constant_values=1)
    x2 = xf.reshape(rows, _LANES)
    t2 = tf.reshape(rows, _LANES)

    # Tile geometry: br=8192 rows * 128 lanes * 4 B = 4 MiB per input block;
    # 2 inputs x 2 pipeline buffers = 16 MiB -- safe on v7x (64 MiB VMEM/TC), tiny on v5e/v6e.
    br = _round_up(min(block_rows, rows), _SUBLANES)
    acc_rows = 32 if br % 32 == 0 else (16 if br % 16 == 0 else _SUBLANES)
    blocks_total = pl.cdiv(rows, br)
    npar = max(1, min(num_parallel, blocks_total))
    bps = pl.cdiv(blocks_total, npar)      # blocks per parallel split

    def in_map(p, j):
        # Clamp so splits whose last steps run past the array re-read the final valid block;
        # those steps are fully masked out inside the kernel.
        return (jnp.minimum(p * bps + j, blocks_total - 1), 0)

    def kernel(x_ref, t_ref, o_ref):
        j = pl.program_id(1)

        @pl.when(j == 0)
        def _init():
            o_ref[...] = jnp.zeros_like(o_ref)

        xb = x_ref[...].astype(jnp.float32)
        tb = t_ref[...].astype(jnp.float32)
        h = jnp.maximum(MARGIN - xb * tb, 0.0)

        g = pl.program_id(0) * bps + j            # global (unclamped) block index

        @pl.when((g + 1) * br <= rows)
        def _full_block():
            # Pure VPU adds into acc_rows//8 independent vreg accumulators (ILP), no masking.
            o_ref[...] += jnp.sum(h.reshape(-1, acc_rows, _LANES), axis=0)

        @pl.when((g + 1) * br > rows)
        def _tail_block():
            # Last (possibly partial / clamped) block: mask rows beyond the real row count.
            rid = g * br + jax.lax.broadcasted_iota(jnp.int32, (br, _LANES), 0)
            hm = jnp.where(rid < rows, h, 0.0)
            o_ref[...] += jnp.sum(hm.reshape(-1, acc_rows, _LANES), axis=0)

    partials = pl.pallas_call(
        kernel,
        out_shape=jax.ShapeDtypeStruct((npar * acc_rows, _LANES), jnp.float32),
        grid_spec=pltpu.PrefetchScalarGridSpec(
            num_scalar_prefetch=0,
            grid=(npar, bps),
            in_specs=[
                pl.BlockSpec((br, _LANES), in_map),
                pl.BlockSpec((br, _LANES), in_map),
            ],
            # Lane-dense, full-vreg output slab per split; resident across the reduction axis.
            out_specs=pl.BlockSpec((acc_rows, _LANES), lambda p, j: (p, 0)),
        ),
        compiler_params=pltpu.CompilerParams(
            dimension_semantics=("parallel", "arbitrary"),
            vmem_limit_bytes=48 * 1024 * 1024,
        ),
        cost_estimate=pl.CostEstimate(
            flops=4 * n,      # mul, sub, max, accumulate-add per element
            transcendentals=0,
            bytes_accessed=n * (x.dtype.itemsize + target.dtype.itemsize)
                           + npar * acc_rows * _LANES * 4,
        ),
    )(x2, t2)

    # Single cross-lane/sublane reduce + mean over the TRUE element count, in the wrapper.
    return jnp.sum(partials) / n


if __name__ == "__main__":
    k1, k2, k3, k4 = jax.random.split(jax.random.PRNGKey(0), 4)

    # Classifier-style logits/targets; C deliberately NOT a multiple of 128 to exercise the
    # ragged-tail + partial-block-masking path.  min_kernel_elems=0 forces the Pallas path even
    # at this small size (real callers would get the plain-JAX fast path here).
    B, C = 16, 100
    x = jax.random.normal(k1, (B, C), dtype=jnp.float32)
    t = jnp.where(jax.random.bernoulli(k2, 0.5, (B, C)), 1.0, -1.0).astype(jnp.float32)
    loss = jax.block_until_ready(hinge_loss(x, t, min_kernel_elems=0))
    ref = jnp.mean(jnp.maximum(MARGIN - x * t, 0.0))
    assert jnp.allclose(loss, ref, rtol=1e-6, atol=1e-6), (loss, ref)

    # Lane-aligned case: zero-copy reshape, multiple blocks, 2-way parallel split.
    B2, C2 = 256, 512
    x2 = jax.random.normal(k3, (B2, C2), dtype=jnp.float32)
    t2 = jnp.where(jax.random.bernoulli(k4, 0.5, (B2, C2)), 1.0, -1.0).astype(jnp.float32)
    loss2 = jax.block_until_ready(
        hinge_loss(x2, t2, block_rows=128, num_parallel=2, min_kernel_elems=0))
    ref2 = jnp.mean(jnp.maximum(MARGIN - x2 * t2, 0.0))
    assert jnp.allclose(loss2, ref2, rtol=1e-5, atol=1e-6), (loss2, ref2)

    print("KERNEL_OK")
</pallas_src>

<mosaic_0001>
module attributes {stable_mosaic.version = 11 : i64} {
  func.func @kernel(%arg0: i32, %arg1: i32, %arg2: memref<16x128xf32, #tpu.memory_space<vmem>>, %arg3: memref<16x128xf32, #tpu.memory_space<vmem>>, %arg4: memref<16x128xf32, #tpu.memory_space<vmem>>) attributes {dimension_semantics = [#tpu.dimension_semantics<parallel>, #tpu.dimension_semantics<arbitrary>], iteration_bounds = array<i64: 1, 1>, scalar_prefetch = 0 : i64, scratch_operands = 0 : i64, tpu.core_type = #tpu.core_type<tc>, window_params = [{transform_indices = @transform_0, window_bounds = array<i64: 16, 128>}, {transform_indices = @transform_1, window_bounds = array<i64: 16, 128>}, {transform_indices = @transform_2, window_bounds = array<i64: 16, 128>}]} {
    %c0_i32 = arith.constant 0 : i32
    %0 = arith.cmpi eq, %arg1, %c0_i32 : i32
    %1 = arith.extui %0 : i1 to i32
    %c0_i32_0 = arith.constant 0 : i32
    %2 = arith.cmpi ne, %1, %c0_i32_0 : i32
    scf.if %2 {
      %cst_11 = arith.constant 0.000000e+00 : f32
      %22 = vector.broadcast %cst_11 : f32 to vector<16x128xf32>
      %c0_12 = arith.constant 0 : index
      %c0_13 = arith.constant 0 : index
      %23 = vector.load %arg4[%c0_12, %c0_13] : memref<16x128xf32, #tpu.memory_space<vmem>>, vector<16x128xf32>
      tpu.vector_store %arg4[%c0_12, %c0_13], %22 {strides = array<i32>} : memref<16x128xf32, #tpu.memory_space<vmem>>, vector<16x128xf32>,
    } else {
    }
    %c0 = arith.constant 0 : index
    %c0_1 = arith.constant 0 : index
    %3 = vector.load %arg2[%c0, %c0_1] : memref<16x128xf32, #tpu.memory_space<vmem>>, vector<16x128xf32>
    %c0_2 = arith.constant 0 : index
    %c0_3 = arith.constant 0 : index
    %4 = vector.load %arg3[%c0_2, %c0_3] : memref<16x128xf32, #tpu.memory_space<vmem>>, vector<16x128xf32>
    %5 = arith.mulf %3, %4 : vector<16x128xf32>
    %cst = arith.constant 1.000000e+00 : f32
    %6 = vector.broadcast %cst : f32 to vector<16x128xf32>
    %7 = arith.subf %6, %5 : vector<16x128xf32>
    %cst_4 = arith.constant 0.000000e+00 : f32
    %8 = vector.broadcast %cst_4 : f32 to vector<16x128xf32>
    %9 = arith.maximumf %7, %8 : vector<16x128xf32>
    %c1_i32 = arith.constant 1 : i32
    %10 = arith.muli %arg0, %c1_i32 : i32
    %11 = arith.addi %10, %arg1 : i32
    %c1_i32_5 = arith.constant 1 : i32
    %12 = arith.addi %11, %c1_i32_5 : i32
    %c16_i32 = arith.constant 16 : i32
    %13 = arith.muli %12, %c16_i32 : i32
    %c13_i32 = arith.constant 13 : i32
    %14 = arith.cmpi sle, %13, %c13_i32 : i32
    %15 = arith.extui %14 : i1 to i32
    %c0_i32_6 = arith.constant 0 : i32
    %16 = arith.cmpi ne, %15, %c0_i32_6 : i32
    scf.if %16 {
      %c0_11 = arith.constant 0 : index
      %c0_12 = arith.constant 0 : index
      %22 = vector.load %arg4[%c0_11, %c0_12] : memref<16x128xf32, #tpu.memory_space<vmem>>, vector<16x128xf32>
      %23 = vector.shape_cast %9 : vector<16x128xf32> to vector<1x16x128xf32>
      %cst_13 = arith.constant dense<0.000000e+00> : vector<16x128xf32>
      %24 = vector.multi_reduction <add>, %23, %cst_13 [0] : vector<1x16x128xf32> to vector<16x128xf32>
      %25 = arith.addf %22, %24 : vector<16x128xf32>
      %c0_14 = arith.constant 0 : index
      %c0_15 = arith.constant 0 : index
      %26 = vector.load %arg4[%c0_14, %c0_15] : memref<16x128xf32, #tpu.memory_space<vmem>>, vector<16x128xf32>
      tpu.vector_store %arg4[%c0_14, %c0_15], %25 {strides = array<i32>} : memref<16x128xf32, #tpu.memory_space<vmem>>, vector<16x128xf32>,
    } else {
    }
    %c1_i32_7 = arith.constant 1 : i32
    %17 = arith.addi %11, %c1_i32_7 : i32
    %c16_i32_8 = arith.constant 16 : i32
    %18 = arith.muli %17, %c16_i32_8 : i32
    %c13_i32_9 = arith.constant 13 : i32
    %19 = arith.cmpi sgt, %18, %c13_i32_9 : i32
    %20 = arith.extui %19 : i1 to i32
    %c0_i32_10 = arith.constant 0 : i32
    %21 = arith.cmpi ne, %20, %c0_i32_10 : i32
    scf.if %21 {
      %c16_i32_11 = arith.constant 16 : i32
      %22 = arith.muli %11, %c16_i32_11 : i32
      %23 = tpu.iota {dimensions = array<i32: 0>} : vector<16x128xi32>
      %24 = vector.broadcast %22 : i32 to vector<16x128xi32>
      %25 = arith.addi %24, %23 : vector<16x128xi32>
      %c13_i32_12 = arith.constant 13 : i32
      %26 = vector.broadcast %c13_i32_12 : i32 to vector<16x128xi32>
      %27 = arith.cmpi slt, %25, %26 : vector<16x128xi32>
      %cst_13 = arith.constant 0.000000e+00 : f32
      %28 = vector.broadcast %cst_13 : f32 to vector<16x128xf32>
      %29 = arith.select %27, %9, %28 : vector<16x128xi1>, vector<16x128xf32>
      %c0_14 = arith.constant 0 : index
      %c0_15 = arith.constant 0 : index
      %30 = vector.load %arg4[%c0_14, %c0_15] : memref<16x128xf32, #tpu.memory_space<vmem>>, vector<16x128xf32>
      %31 = vector.shape_cast %29 : vector<16x128xf32> to vector<1x16x128xf32>
      %cst_16 = arith.constant dense<0.000000e+00> : vector<16x128xf32>
      %32 = vector.multi_reduction <add>, %31, %cst_16 [0] : vector<1x16x128xf32> to vector<16x128xf32>
      %33 = arith.addf %30, %32 : vector<16x128xf32>
      %c0_17 = arith.constant 0 : index
      %c0_18 = arith.constant 0 : index
      %34 = vector.load %arg4[%c0_17, %c0_18] : memref<16x128xf32, #tpu.memory_space<vmem>>, vector<16x128xf32>
      tpu.vector_store %arg4[%c0_17, %c0_18], %33 {strides = array<i32>} : memref<16x128xf32, #tpu.memory_space<vmem>>, vector<16x128xf32>,
    } else {
    }
    return
  }
  func.func @transform_0(%arg0: i32, %arg1: i32) -> (i32, i32) {
    %c1_i32 = arith.constant 1 : i32
    %0 = arith.muli %arg0, %c1_i32 : i32
    %1 = arith.addi %0, %arg1 : i32
    %c0_i32 = arith.constant 0 : i32
    %2 = arith.minsi %1, %c0_i32 : i32
    %c0_i32_0 = arith.constant 0 : i32
    %c0_i32_1 = arith.constant 0 : i32
    return %2, %c0_i32_0 : i32, i32
  }
  func.func @transform_1(%arg0: i32, %arg1: i32) -> (i32, i32) {
    %c1_i32 = arith.constant 1 : i32
    %0 = arith.muli %arg0, %c1_i32 : i32
    %1 = arith.addi %0, %arg1 : i32
    %c0_i32 = arith.constant 0 : i32
    %2 = arith.minsi %1, %c0_i32 : i32
    %c0_i32_0 = arith.constant 0 : i32
    %c0_i32_1 = arith.constant 0 : i32
    return %2, %c0_i32_0 : i32, i32
  }
  func.func @transform_2(%arg0: i32, %arg1: i32) -> (i32, i32) {
    %c0_i32 = arith.constant 0 : i32
    %c0_i32_0 = arith.constant 0 : i32
    return %arg0, %c0_i32 : i32, i32
  }
}

</mosaic_0001>

<llo_original>
// kernel: tpu_custom_call.1
$region0: #{tpu_custom_call.1}
  #allocation0 [shape = 'u32[]', space=smem, size = 0x4, offset = 0x4, fixed_abs, tag = 'smem constant byte address 0x4 - core index']
  #allocation1 [shape = 'u32[144,128]{1,0:T(1,128)}', space=vmem, size = 0x12000, scoped, tag = 'internal scratch']
  %s0 = inlined_call_operand.hbm [shape: f32[13,128], index: 0, kind: input, shape index: {}]
  %s1 = inlined_call_operand.hbm [shape: f32[13,128], index: 1, kind: input, shape index: {}]
  %s2 = inlined_call_operand.hbm [shape: f32[16,128], index: 2, kind: output, shape index: {}]
  %s3 = sld [smem:[#allocation0]]
  $region38: #{tpu_custom_call.1} parent=0
    _
  %s5 = ssub.s32 1, %s3
  %s6 = scalar_select 0, %s5, %s3
  $region1: #{tpu_custom_call.1} parent=0
    #allocation2 [shape = 'u8[8192]{0}', space=vmem, size = 0x2000, scoped, tag = 'input window, operand 0, single buffered']
    #allocation3 [shape = 's32[1]{0}', space=sflag, size = 0x4, scoped, tag = 'scoped memory for tpu_custom_call.1']
    #allocation4 [shape = 's32[1]{0}', space=sflag, size = 0x4, scoped, tag = 'scoped memory for tpu_custom_call.1']
    #allocation5 [shape = 'u8[8192]{0}', space=vmem, size = 0x2000, scoped, tag = 'input window, operand 1, single buffered']
    #allocation6 [shape = 's32[1]{0}', space=sflag, size = 0x4, scoped, tag = 'scoped memory for tpu_custom_call.1']
    #allocation7 [shape = 'u8[8192]{0}', space=vmem, size = 0x2000, scoped, tag = 'output window, operand 0, single buffered']
    %7 = vsyncpa [#allocation3], 0
    %8 = vsyncpa [#allocation6], 0
    %9 = vsyncpa [#allocation4], 0
    // Predicated region
    $region2: #{tpu_custom_call.1} parent=1 // pred_check
      _
    $region3: #{tpu_custom_call.1} parent=1 // pred_check_branch
      %11 = sbr.rel (0) target = $region5
    $region4: #{tpu_custom_call.1} parent=1 // pred_region
      %s12 = sadd.s32 0, 0
      %p13 = scmp.lt.s32.totalorder %s12, 0
      %s14 = scalar_select %p13, %s12, 0
      %s15 = smul.u32 2, %s14
      %s17 = ssub.s32 256, 256
      %18 = vsyncadd [#allocation3], %s17
      %s19 = smul.addr %s15, 128
      %s20 = scalar_lea.hbm %s0, %s19
      %s21 = sshll.u32 [#allocation2], 4
      %s22 = int_to_ptr.vmem [resolvable:$true] %s21
      %27 = dma.hbm_to_vmem [thread:$0]  %s20, 256, %s22, [#allocation3], 128, 128, 8
    $region5: #{tpu_custom_call.1} parent=1 // pred_fallthru
      _
    // Predicated region
    $region6: #{tpu_custom_call.1} parent=1 // pred_check
      _
    $region7: #{tpu_custom_call.1} parent=1 // pred_check_branch
      %29 = sbr.rel (0) target = $region9
    $region8: #{tpu_custom_call.1} parent=1 // pred_region
      %s30 = sadd.s32 0, 0
      %p31 = scmp.lt.s32.totalorder %s30, 0
      %s32 = scalar_select %p31, %s30, 0
      %s33 = smul.u32 2, %s32
      %s35 = ssub.s32 256, 256
      %36 = vsyncadd [#allocation6], %s35
      %s37 = smul.addr %s33, 128
      %s38 = scalar_lea.hbm %s1, %s37
      %s39 = sshll.u32 [#allocation5], 4
      %s40 = int_to_ptr.vmem [resolvable:$true] %s39
      %45 = dma.hbm_to_vmem [thread:$0]  %s38, 256, %s40, [#allocation6], 128, 128, 8
    $region9: #{tpu_custom_call.1} parent=1 // pred_fallthru
      _
    // Predicated region
    $region10: #{tpu_custom_call.1} parent=1 // pred_check
      _
    $region11: #{tpu_custom_call.1} parent=1 // pred_check_branch
      %47 = sbr.rel (0) target = $region13
    $region12: #{tpu_custom_call.1} parent=1 // pred_region
      %48 = dma.done [#allocation3], 256
    $region13: #{tpu_custom_call.1} parent=1 // pred_fallthru
      _
    // Predicated region
    $region14: #{tpu_custom_call.1} parent=1 // pred_check
      _
    $region15: #{tpu_custom_call.1} parent=1 // pred_check_branch
      %50 = sbr.rel (0) target = $region17
    $region16: #{tpu_custom_call.1} parent=1 // pred_region
      %51 = dma.done [#allocation6], 256
    $region17: #{tpu_custom_call.1} parent=1 // pred_fallthru
      _
    %s52 = sadd.s32 0, 0
    %p53 = scmp.lt.s32.totalorder %s52, 0
    %s54 = scalar_select %p53, %s52, 0
    %s55 = smul.u32 2, %s54
    %s56 = sadd.s32 0, 0
    %p57 = scmp.lt.s32.totalorder %s56, 0
    %s58 = scalar_select %p57, %s56, 0
    %s59 = smul.u32 2, %s58
    %p60 = scmp.eq.s32.totalorder 0, 0
    // Predicated region
    $region18: #{tpu_custom_call.1} parent=1 // pred_check
      %p61 = pneg %p60
    $region19: #{tpu_custom_call.1} parent=1 // pred_check_branch
      %63 = sbr.rel (%p61) target = $region21
    $region20: #{tpu_custom_call.1} parent=1 // pred_region
      %64 = vst [vmem:[#allocation7] sm:$0xff] 0.0
      %65 = vst [vmem:[#allocation7 + $0x8] sm:$0xff] 0.0
    $region21: #{tpu_custom_call.1} parent=1 // pred_fallthru
      _
    %v66 = vld [vmem:[#allocation2] sm:$0xff]
    %v67 = vld [vmem:[#allocation2 + $0x8] sm:$0xff]
    %v68 = vld [vmem:[#allocation5] sm:$0xff]
    %v69 = vld [vmem:[#allocation5 + $0x8] sm:$0xff]
    %v70 = vmul.f32 %v66, %v68
    %v71 = vmul.f32 %v67, %v69
    %v72 = vsub.f32 1.0, %v70
    %v73 = vsub.f32 1.0, %v71
    %v74 = vmax.f32 %v72, 0.0
    %v75 = vmax.f32 %v73, 0.0
    %s76 = sadd.s32 0, 0
    %s77 = sadd.s32 %s76, 1
    %s78 = smul.u32 %s77, 16
    %p79 = scmp.le.s32.totalorder %s78, 13
    // Predicated region
    $region22: #{tpu_custom_call.1} parent=1 // pred_check
      %p80 = pneg %p79
    $region23: #{tpu_custom_call.1} parent=1 // pred_check_branch
      %82 = sbr.rel (%p80) target = $region25
    $region24: #{tpu_custom_call.1} parent=1 // pred_region
      %v83 = vld [vmem:[#allocation7] sm:$0xff]
      %v84 = vld [vmem:[#allocation7 + $0x8] sm:$0xff]
      %v85 = vadd.f32 %v74, 0.0
      %v86 = vadd.f32 %v75, 0.0
      %v87 = vadd.f32 %v83, %v85
      %v88 = vadd.f32 %v84, %v86
      %89 = vst [vmem:[#allocation7] sm:$0xff] %v87
      %90 = vst [vmem:[#allocation7 + $0x8] sm:$0xff] %v88
    $region25: #{tpu_custom_call.1} parent=1 // pred_fallthru
      _
    %p91 = scmp.gt.s32.totalorder %s78, 13
    // Predicated region
    $region26: #{tpu_custom_call.1} parent=1 // pred_check
      %p92 = pneg %p91
    $region27: #{tpu_custom_call.1} parent=1 // pred_check_branch
      %94 = sbr.rel (%p92) target = $region29
    $region28: #{tpu_custom_call.1} parent=1 // pred_region
      %s95 = smul.u32 %s76, 16
      %v96 = vlaneseq
      %v97 = vshrl.u32 %v96, 7
      %v98 = vadd.s32 %v97, 8
      %v99 = vstv %s95
      %v100 = vadd.s32 %v99, %v97
      %v101 = vadd.s32 %v99, %v98
      %vm102 = vcmp.lt.s32.totalorder %v100, 13
      %vm103 = vcmp.lt.s32.totalorder %v101, 13
      %v104 = vsel %vm102, %v74, 0.0
      %v105 = vsel %vm103, %v75, 0.0
      %v106 = vld [vmem:[#allocation7] sm:$0xff]
      %v107 = vld [vmem:[#allocation7 + $0x8] sm:$0xff]
      %v108 = vadd.f32 %v104, 0.0
      %v109 = vadd.f32 %v105, 0.0
      %v110 = vadd.f32 %v106, %v108
      %v111 = vadd.f32 %v107, %v109
      %112 = vst [vmem:[#allocation7] sm:$0xff] %v110
      %113 = vst [vmem:[#allocation7 + $0x8] sm:$0xff] %v111
    $region29: #{tpu_custom_call.1} parent=1 // pred_fallthru
      _
    // Predicated region
    $region30: #{tpu_custom_call.1} parent=1 // pred_check
      _
    $region31: #{tpu_custom_call.1} parent=1 // pred_check_branch
      %115 = sbr.rel (0) target = $region33
    $region32: #{tpu_custom_call.1} parent=1 // pred_region
      %s117 = ssub.s32 256, 256
      %118 = vsyncadd [#allocation4], %s117
      %s119 = sshll.u32 [#allocation7], 4
      %s120 = int_to_ptr.vmem [resolvable:$true] %s119
      %125 = dma.vmem_to_hbm [thread:$0]  %s120, 256, %s2, [#allocation4], 128, 128, 8
    $region33: #{tpu_custom_call.1} parent=1 // pred_fallthru
      _
    // Predicated region
    $region34: #{tpu_custom_call.1} parent=1 // pred_check
      _
    $region35: #{tpu_custom_call.1} parent=1 // pred_check_branch
      %127 = sbr.rel (0) target = $region37
    $region36: #{tpu_custom_call.1} parent=1 // pred_region
      %128 = dma.done [#allocation4], 256
    $region37: #{tpu_custom_call.1} parent=1 // pred_fallthru
      _
    %129 = vsyncpa [#allocation3], 1
    %130 = vsyncpa [#allocation6], 1
    %131 = vsyncpa [#allocation4], 1

</llo_original>
